<compile_context>
chip_gen: v7x
topology: tpu7x:2x2x1
jax: 0.10.0
libtpu: 0.0.40
codegen_flags: <defaults>
</compile_context>

<pallas_src>
import jax
import jax.numpy as jnp
from jax.experimental import pallas as pl
from jax.experimental.pallas import tpu as pltpu


def _norm_kernel(mean_ref, inv_std_ref, x_ref, o_ref):
    # mean_ref / inv_std_ref : (bm, 1)  per-row scalars, lane-broadcast
    # x_ref / o_ref          : (bm, bn) lane-dense tiles of the flat image
    o_ref[...] = (x_ref[...] - mean_ref[...]) * inv_std_ref[...]


def _largest_aligned_divisor(n, align, cap):
    """Largest multiple of `align` that divides n and is <= cap (None if none)."""
    best = None
    b = align
    limit = min(n, cap)
    while b <= limit:
        if n % b == 0:
            best = b
        b += align
    return best


def _generation_config():
    """(target_block_bytes, vmem_limit_cap) tuned per TPU generation."""
    try:
        info = pltpu.get_tpu_info()
        vmem = getattr(info, "vmem_capacity_bytes", None)
    except Exception:  # no TPU info available at trace/driver time
        vmem = None
    if vmem is None:
        return 2 * 1024 * 1024, 32 * 1024 * 1024      # conservative default
    if vmem >= 100 * 1024 * 1024:                      # v5e / v6e: 128 MiB VMEM
        return 8 * 1024 * 1024, 64 * 1024 * 1024
    return 4 * 1024 * 1024, 40 * 1024 * 1024           # v7x: 64 MiB VMEM per TC


def normalization(img, mean, std, *, target_block_bytes=None,
                  min_pallas_bytes=256 * 1024):
    """(img - mean[:, None, None]) / std[:, None, None] over an NCHW image."""
    B, C, H, W = img.shape
    assert mean.shape == (C,) and std.shape == (C,)
    M, N = B * C, H * W
    itemsize = jnp.dtype(img.dtype).itemsize
    total_bytes = M * N * itemsize

    # ---- small-input fast path: pallas_call fixed cost dominates below this ----
    if total_bytes < min_pallas_bytes:
        m = mean.astype(img.dtype)[None, :, None, None]
        s = std.astype(img.dtype)[None, :, None, None]
        return (img - m) / s

    default_block_bytes, vmem_cap = _generation_config()
    if target_block_bytes is None:
        target_block_bytes = default_block_bytes

    # Exact reciprocal in the wrapper (f32 divide over C elements); the kernel
    # then does only sub + mul, within ~1 ulp of torch's (x - mean) / std.
    inv_std = (1.0 / std.astype(jnp.float32)).astype(img.dtype)
    mean_c = mean.astype(img.dtype)
    # Per-row (= per (batch, channel)) scalars; row b*C + c -> channel c,
    # matching the contiguous NCHW reshape below.
    row_mean = jnp.tile(mean_c, B).reshape(M, 1)
    row_inv_std = jnp.tile(inv_std, B).reshape(M, 1)

    # Lane-dense view: H*W is the last (lane) dimension.
    x = img.reshape(M, N)

    # ---- lane block (bn): multiple of 128 (or full N), near the byte target ----
    target_elems = max(128, target_block_bytes // itemsize)
    if N <= target_elems:
        bn = N                                           # full extent is always legal
    else:
        bn = _largest_aligned_divisor(N, 128, target_elems)
        if bn is None or bn < target_elems // 2:
            bn = max(128, (target_elems // 128) * 128)   # partial last tile, masked

    # ---- sublane block (bm): dtype-native packing alignment ----
    sub_align = max(8, 32 // itemsize)                   # 8 f32, 16 bf16, 32 int8/fp8
    rows_target = max(1, target_elems // bn)
    if M <= rows_target:
        bm = M
    else:
        bm = _largest_aligned_divisor(M, sub_align, rows_target)
        if bm is None:
            bm = max(sub_align, (rows_target // sub_align) * sub_align)
        if bm >= M:
            bm = M

    grid_m = pl.cdiv(M, bm)
    grid_n = pl.cdiv(N, bn)

    # Put the axis with more blocks first so megacore (v7x: 2 TCs) can shard it.
    if grid_n >= grid_m:
        grid = (grid_n, grid_m)
        img_map = lambda jn, jm: (jm, jn)
        row_map = lambda jn, jm: (jm, 0)
    else:
        grid = (grid_m, grid_n)
        img_map = lambda jm, jn: (jm, jn)
        row_map = lambda jm, jn: (jm, 0)

    block_bytes = bm * bn * itemsize
    # Double-buffered input + output tiles (+ tiny scalar blocks) with slack,
    # capped per generation so v7x never overshoots its 64 MiB VMEM.
    vmem_limit = int(min(vmem_cap,
                         max(4 * 1024 * 1024, 4 * block_bytes + 2 * 1024 * 1024)))

    out = pl.pallas_call(
        _norm_kernel,
        out_shape=jax.ShapeDtypeStruct((M, N), img.dtype),
        grid=grid,
        in_specs=[
            pl.BlockSpec((bm, 1), row_map),    # per-row mean
            pl.BlockSpec((bm, 1), row_map),    # per-row 1/std
            pl.BlockSpec((bm, bn), img_map),   # image tile
        ],
        out_specs=pl.BlockSpec((bm, bn), img_map),
        compiler_params=pltpu.CompilerParams(
            dimension_semantics=("parallel", "parallel"),
            vmem_limit_bytes=vmem_limit),
        cost_estimate=pl.CostEstimate(
            flops=2 * M * N,
            transcendentals=0,
            bytes_accessed=2 * M * N * itemsize + 2 * M * itemsize),
    )(row_mean, row_inv_std, x)
    return out.reshape(B, C, H, W)


if __name__ == "__main__":
    # Same constants as the PyTorch module.
    mean = jnp.array([0.485, 0.456, 0.406], dtype=jnp.float32)
    std = jnp.array([0.229, 0.224, 0.225], dtype=jnp.float32)

    key = jax.random.PRNGKey(0)

    # Small deterministic NCHW input: batch=2, channels=3 (fixed by the
    # module's 3-element mean/std), spatial=16x16.
    img = jax.random.uniform(key, (2, 3, 16, 16), dtype=jnp.float32)
    ref = (img - mean[None, :, None, None]) / std[None, :, None, None]

    # 1) Pallas path, forced (the test shape is tiny, below the fast-path cut).
    out = jax.block_until_ready(normalization(img, mean, std, min_pallas_bytes=0))
    assert out.shape == ref.shape and out.dtype == ref.dtype
    assert jnp.allclose(out, ref, rtol=1e-5, atol=1e-6), float(
        jnp.max(jnp.abs(out - ref)))

    # 2) Pallas path with a tiny block target -> multi-block grid (lane split).
    out2 = jax.block_until_ready(
        normalization(img, mean, std, min_pallas_bytes=0, target_block_bytes=512))
    assert jnp.allclose(out2, ref, rtol=1e-5, atol=1e-6)

    # 3) Non-128-multiple spatial size -> exercises cdiv / masked partial tiles.
    img_b = jax.random.uniform(jax.random.PRNGKey(1), (2, 3, 16, 20),
                               dtype=jnp.float32)
    ref_b = (img_b - mean[None, :, None, None]) / std[None, :, None, None]
    out_b = jax.block_until_ready(
        normalization(img_b, mean, std, min_pallas_bytes=0, target_block_bytes=512))
    assert jnp.allclose(out_b, ref_b, rtol=1e-5, atol=1e-6)

    # 4) Default call on the tiny input takes the jnp fast path.
    out3 = jax.block_until_ready(normalization(img, mean, std))
    assert jnp.allclose(out3, ref, rtol=1e-5, atol=1e-6)

    print("KERNEL_OK")
</pallas_src>

<mosaic_0001>
module attributes {stable_mosaic.version = 11 : i64} {
  func.func @_norm_kernel(%arg0: i32, %arg1: i32, %arg2: memref<6x1xf32, #tpu.memory_space<vmem>>, %arg3: memref<6x1xf32, #tpu.memory_space<vmem>>, %arg4: memref<6x256xf32, #tpu.memory_space<vmem>>, %arg5: memref<6x256xf32, #tpu.memory_space<vmem>>) attributes {dimension_semantics = [#tpu.dimension_semantics<parallel>, #tpu.dimension_semantics<parallel>], iteration_bounds = array<i64: 1, 1>, scalar_prefetch = 0 : i64, scratch_operands = 0 : i64, tpu.core_type = #tpu.core_type<tc>, window_params = [{transform_indices = @transform_0, window_bounds = array<i64: 6, 1>}, {transform_indices = @transform_1, window_bounds = array<i64: 6, 1>}, {transform_indices = @transform_2, window_bounds = array<i64: 6, 256>}, {transform_indices = @transform_3, window_bounds = array<i64: 6, 256>}]} {
    %c0 = arith.constant 0 : index
    %c0_0 = arith.constant 0 : index
    %0 = vector.load %arg4[%c0, %c0_0] : memref<6x256xf32, #tpu.memory_space<vmem>>, vector<6x256xf32>
    %c0_1 = arith.constant 0 : index
    %c0_2 = arith.constant 0 : index
    %1 = vector.load %arg2[%c0_1, %c0_2] : memref<6x1xf32, #tpu.memory_space<vmem>>, vector<6x1xf32>
    %2 = vector.broadcast %1 : vector<6x1xf32> to vector<6x256xf32>
    %3 = arith.subf %0, %2 : vector<6x256xf32>
    %c0_3 = arith.constant 0 : index
    %c0_4 = arith.constant 0 : index
    %4 = vector.load %arg3[%c0_3, %c0_4] : memref<6x1xf32, #tpu.memory_space<vmem>>, vector<6x1xf32>
    %5 = vector.broadcast %4 : vector<6x1xf32> to vector<6x256xf32>
    %6 = arith.mulf %3, %5 : vector<6x256xf32>
    %c0_5 = arith.constant 0 : index
    %c0_6 = arith.constant 0 : index
    %7 = vector.load %arg5[%c0_5, %c0_6] : memref<6x256xf32, #tpu.memory_space<vmem>>, vector<6x256xf32>
    tpu.vector_store %arg5[%c0_5, %c0_6], %6 {strides = array<i32>} : memref<6x256xf32, #tpu.memory_space<vmem>>, vector<6x256xf32>,
    return
  }
  func.func @transform_0(%arg0: i32, %arg1: i32) -> (i32, i32) {
    %c0_i32 = arith.constant 0 : i32
    %c0_i32_0 = arith.constant 0 : i32
    return %arg1, %c0_i32 : i32, i32
  }
  func.func @transform_1(%arg0: i32, %arg1: i32) -> (i32, i32) {
    %c0_i32 = arith.constant 0 : i32
    %c0_i32_0 = arith.constant 0 : i32
    return %arg1, %c0_i32 : i32, i32
  }
  func.func @transform_2(%arg0: i32, %arg1: i32) -> (i32, i32) {
    %c0_i32 = arith.constant 0 : i32
    return %arg1, %arg0 : i32, i32
  }
  func.func @transform_3(%arg0: i32, %arg1: i32) -> (i32, i32) {
    %c0_i32 = arith.constant 0 : i32
    return %arg1, %arg0 : i32, i32
  }
}

</mosaic_0001>

<llo_original>
// kernel: tpu_custom_call.1
$region0: #{tpu_custom_call.1}
  #allocation0 [shape = 'u32[]', space=smem, size = 0x4, offset = 0x4, fixed_abs, tag = 'smem constant byte address 0x4 - core index']
  #allocation1 [shape = 'u32[144,128]{1,0:T(1,128)}', space=vmem, size = 0x12000, scoped, tag = 'internal scratch']
  %s0 = inlined_call_operand.vmem [shape: f32[6,1], index: 0, kind: input, shape index: {}]
  %s1 = inlined_call_operand.vmem [shape: f32[6,1], index: 1, kind: input, shape index: {}]
  %s2 = inlined_call_operand.vmem [shape: f32[6,256], index: 2, kind: input, shape index: {}]
  %s3 = inlined_call_operand.hbm [shape: f32[6,256], index: 3, kind: output, shape index: {}]
  %s4 = sld [smem:[#allocation0]]
  $region22: #{tpu_custom_call.1} parent=0
    _
  %s6 = ssub.s32 1, %s4
  %s7 = scalar_select 0, %s6, %s4
  $region1: #{tpu_custom_call.1} parent=0
    #allocation2 [shape = 'u8[8192]{0}', space=vmem, size = 0x2000, scoped, tag = 'output window, operand 0, single buffered']
    #allocation3 [shape = 's32[1]{0}', space=sflag, size = 0x4, scoped, tag = 'scoped memory for tpu_custom_call.1']
    %8 = vsyncpa [#allocation3], 0
    // Predicated region
    $region2: #{tpu_custom_call.1} parent=1 // pred_check
      _
    $region3: #{tpu_custom_call.1} parent=1 // pred_check_branch
      %10 = sbr.rel (0) target = $region5
    $region4: #{tpu_custom_call.1} parent=1 // pred_region
      _
    $region5: #{tpu_custom_call.1} parent=1 // pred_fallthru
      _
    // Predicated region
    $region6: #{tpu_custom_call.1} parent=1 // pred_check
      _
    $region7: #{tpu_custom_call.1} parent=1 // pred_check_branch
      %12 = sbr.rel (0) target = $region9
    $region8: #{tpu_custom_call.1} parent=1 // pred_region
      _
    $region9: #{tpu_custom_call.1} parent=1 // pred_fallthru
      _
    // Predicated region
    $region10: #{tpu_custom_call.1} parent=1 // pred_check
      _
    $region11: #{tpu_custom_call.1} parent=1 // pred_check_branch
      %14 = sbr.rel (0) target = $region13
    $region12: #{tpu_custom_call.1} parent=1 // pred_region
      _
    $region13: #{tpu_custom_call.1} parent=1 // pred_fallthru
      _
    %v15 = vld [vmem:[%s2] sm:$0x3f]
    %v16 = vld [vmem:[%s2 + $0x8] sm:$0x3f]
    %v17 = vld [vmem:[%s0] sm:$0x3f]
    %19 = vset.pattern.permute.xlu0 0
    %20 = vperm.xlu0 %19, %v17
    %v21 = vpop.permute.xlu0 %20
    %v23 = vsub.f32 %v15, %v21
    %v24 = vsub.f32 %v16, %v21
    %v25 = vld [vmem:[%s1] sm:$0x3f]
    %27 = vset.pattern.permute.xlu0 0
    %28 = vperm.xlu0 %27, %v25
    %v29 = vpop.permute.xlu0 %28
    %v31 = vmul.f32 %v23, %v29
    %v32 = vmul.f32 %v24, %v29
    %33 = vst [vmem:[#allocation2] sm:$0x3f] %v31
    %34 = vst [vmem:[#allocation2 + $0x8] sm:$0x3f] %v32
    // Predicated region
    $region14: #{tpu_custom_call.1} parent=1 // pred_check
      _
    $region15: #{tpu_custom_call.1} parent=1 // pred_check_branch
      %36 = sbr.rel (0) target = $region17
    $region16: #{tpu_custom_call.1} parent=1 // pred_region
      %s38 = ssub.s32 256, 256
      %39 = vsyncadd [#allocation3], %s38
      %s41 = sshll.u32 [#allocation2], 4
      %s42 = int_to_ptr.vmem [resolvable:$true] %s41
      %44 = dma.vmem_to_hbm [thread:$0]  %s42, 256, %s3, [#allocation3]
    $region17: #{tpu_custom_call.1} parent=1 // pred_fallthru
      _
    // Predicated region
    $region18: #{tpu_custom_call.1} parent=1 // pred_check
      _
    $region19: #{tpu_custom_call.1} parent=1 // pred_check_branch
      %46 = sbr.rel (0) target = $region21
    $region20: #{tpu_custom_call.1} parent=1 // pred_region
      %47 = dma.done [#allocation3], 256
    $region21: #{tpu_custom_call.1} parent=1 // pred_fallthru
      _
    %48 = vsyncpa [#allocation3], 1

</llo_original>
